<compile_context>
chip_gen: v6e
topology: v6e:2x2x1
jax: 0.10.0
libtpu: 0.0.40
codegen_flags: <defaults>
</compile_context>

<pallas_src>
import math
from functools import partial

import jax
import jax.numpy as jnp
from jax.experimental import pallas as pl
from jax.experimental.pallas import tpu as pltpu

TRIP_COLS = ['tod', 'road', 'road_prop', 'lng', 'lat', 'weekday', 'seq_i', 'seconds']

LANES = 128
MAX_LANES = 16384                 # cap on the flattened lane width (lcm path)
TARGET_BLOCK_BYTES = 4 << 20      # ~4 MiB per pipelined buffer
VMEM_LIMIT_BYTES = 32 << 20       # in+out double-buffered ~16 MiB + headroom


# ----------------------------- Pallas kernel -------------------------------
def _denorm_kernel(x_ref, scale_ref, shift_ref, o_ref):
    # FMA in f32 regardless of storage dtype; cast only on the store.
    x = x_ref[...].astype(jnp.float32)
    o_ref[...] = (x * scale_ref[...] + shift_ref[...]).astype(o_ref.dtype)


def _lane_layout(n_features):
    """Pick the flattened lane width.

    Returns (lanes, reps): lanes = lcm(F, 128) when that is reasonably small
    (every vreg lane used, full unmasked stores); otherwise keep the feature
    axis as lanes (masked stores only on the final <128-lane chunk).
    """
    f = int(n_features)
    if f <= 0:
        raise ValueError("n_features must be positive")
    lcm = f * (LANES // math.gcd(f, LANES))
    if lcm <= MAX_LANES:
        return lcm, lcm // f
    return f, 1


def _pick_block_rows(rows, lanes, itemsize, target_block_bytes):
    """Row-block size: ~target bytes per buffer, >=2 grid steps when possible."""
    row_bytes = lanes * itemsize
    target = max(8, (target_block_bytes // row_bytes) // 8 * 8)
    if rows <= 16:
        return rows                              # single tiny full-extent block
    if rows <= target:
        # Split into >=2 steps so the "parallel" axis shards across v7x's 2 TCs.
        half = -(-rows // 2)
        return max(8, -(-half // 8) * 8)
    return target


@partial(jax.jit, static_argnames=("lanes", "blk"))
def _denorm_core(arr, scale_row, shift_row, *, lanes, blk):
    orig_shape = arr.shape
    total = arr.size
    rows = -(-total // lanes)
    pad = rows * lanes - total

    x = arr.reshape(-1)
    if pad:
        x = jnp.pad(x, (0, pad))
    x2 = x.reshape(rows, lanes)

    out2 = pl.pallas_call(
        _denorm_kernel,
        out_shape=jax.ShapeDtypeStruct((rows, lanes), arr.dtype),
        grid=(pl.cdiv(rows, blk),),
        in_specs=[
            pl.BlockSpec((blk, lanes), lambda i: (i, 0)),
            pl.BlockSpec((1, lanes), lambda i: (0, 0)),   # VMEM-resident
            pl.BlockSpec((1, lanes), lambda i: (0, 0)),   # VMEM-resident
        ],
        out_specs=pl.BlockSpec((blk, lanes), lambda i: (i, 0)),
        compiler_params=pltpu.CompilerParams(
            dimension_semantics=("parallel",),            # 2-TC sharding on v7x
            vmem_limit_bytes=VMEM_LIMIT_BYTES),
    )(x2, scale_row, shift_row)

    out = out2.reshape(-1)
    if pad:
        out = out[:total]
    return out.reshape(orig_shape)


def denormalize_pallas(arr, scale_row, shift_row, lanes, *,
                       target_block_bytes=TARGET_BLOCK_BYTES):
    """out[..., c] = arr[..., c] * scale[c] + shift[c], fused in one kernel.

    `scale_row`/`shift_row` are (1, lanes) f32 arrays already tiled lanes/F
    times (lane l <-> feature l % F).  Float dtypes expected; integer inputs
    would be truncated by the cast-on-store (unlike the PyTorch float path).
    """
    if arr.size == 0:
        return arr
    itemsize = jnp.dtype(arr.dtype).itemsize
    rows = -(-arr.size // lanes)
    blk = _pick_block_rows(rows, lanes, itemsize, target_block_bytes)
    return _denorm_core(arr, scale_row, shift_row, lanes=lanes, blk=blk)


# ------------------------------ Glue (JAX) ---------------------------------
def build_affine(stat, feat_cols, feat_names, select_cols, norm_type, n_features):
    """Fold the per-column denorm rules into a (scale, shift) pair (f32)."""
    scale = [1.0] * n_features
    shift = [0.0] * n_features
    sel = set(select_cols)
    for col, name in zip(feat_cols, feat_names):
        if col in sel:
            if norm_type == 'zscore':
                scale[col] = float(stat['std'][name])
                shift[col] = float(stat['mean'][name])
            elif norm_type == 'minmax':
                rng = float(stat['max'][name]) - float(stat['min'][name])
                scale[col] = rng / 2.0
                shift[col] = rng / 2.0 + float(stat['min'][name])
            else:
                raise NotImplementedError(norm_type)
    return scale, shift


class Denormalizer:
    def __init__(self, stat, feat_cols, feat_names=None, norm_type='zscore'):
        self.stat = stat
        self.feat_cols = feat_cols
        self.feat_names = (feat_names if feat_names is not None
                           else [TRIP_COLS[c] for c in feat_cols])
        self.norm_type = norm_type
        # Caches the tiled, reshaped (1, lanes) device arrays so repeated calls
        # do no host-side rebuild / re-upload / re-tile.
        self._affine_cache = {}

    def _affine(self, select_cols, n_features):
        key = (tuple(sorted(set(int(c) for c in select_cols))), int(n_features))
        if key not in self._affine_cache:
            scale, shift = build_affine(self.stat, self.feat_cols, self.feat_names,
                                        select_cols, self.norm_type, n_features)
            lanes, reps = _lane_layout(n_features)
            scale_row = jnp.asarray(scale * reps, jnp.float32).reshape(1, lanes)
            shift_row = jnp.asarray(shift * reps, jnp.float32).reshape(1, lanes)
            self._affine_cache[key] = (scale_row, shift_row, lanes)
        return self._affine_cache[key]

    def __call__(self, select_cols, arr, **kwargs):
        scale_row, shift_row, lanes = self._affine(select_cols, arr.shape[-1])
        return denormalize_pallas(arr, scale_row, shift_row, lanes, **kwargs)


# -------------------------- Pure-JAX reference ------------------------------
def reference_denorm(denorm, select_cols, arr):
    ref = arr.astype(jnp.float32)
    for col, name in zip(denorm.feat_cols, denorm.feat_names):
        if col in select_cols:
            c = ref[..., col]
            if denorm.norm_type == 'zscore':
                c = c * denorm.stat['std'][name] + denorm.stat['mean'][name]
            elif denorm.norm_type == 'minmax':
                c = (c + 1.0) / 2.0
                c = c * (denorm.stat['max'][name] - denorm.stat['min'][name]) \
                    + denorm.stat['min'][name]
            ref = ref.at[..., col].set(c)
    return ref


# --------------------------------- Main -------------------------------------
if __name__ == "__main__":
    key = jax.random.PRNGKey(0)
    F = len(TRIP_COLS)  # 8

    # Deterministic synthetic statistics (stand-in for the pandas DataFrame).
    stat = {
        'mean': {name: 0.1 * (i + 1) for i, name in enumerate(TRIP_COLS)},
        'std':  {name: 1.0 + 0.5 * i for i, name in enumerate(TRIP_COLS)},
        'min':  {name: -1.0 * (i + 1) for i, name in enumerate(TRIP_COLS)},
        'max':  {name: 2.0 * (i + 1) for i, name in enumerate(TRIP_COLS)},
    }
    feat_cols = [0, 3, 4, 7]          # tod, lng, lat, seconds
    select_cols = [3, 4, 7]           # only denormalize lng, lat, seconds

    # --- test 1: zscore, f32, exact lane-dense path (total % 128 == 0) ------
    k1, k2, k3, k4 = jax.random.split(key, 4)
    arr1 = jax.random.normal(k1, (2, 8, F), dtype=jnp.float32)
    dn_z = Denormalizer(stat, feat_cols, norm_type='zscore')
    out1 = jax.block_until_ready(dn_z(select_cols, arr1))
    ref1 = reference_denorm(dn_z, select_cols, arr1)
    assert jnp.allclose(out1, ref1, atol=1e-5, rtol=1e-5)

    # --- test 2: minmax, f32, padded lane-dense path (total % 128 != 0) -----
    arr2 = jax.random.normal(k2, (5, 4, F), dtype=jnp.float32)   # 160 elements
    dn_m = Denormalizer(stat, feat_cols, norm_type='minmax')
    out2 = jax.block_until_ready(dn_m(select_cols, arr2))
    ref2 = reference_denorm(dn_m, select_cols, arr2)
    assert jnp.allclose(out2, ref2, atol=1e-5, rtol=1e-5)

    # --- test 3: zscore, bf16 storage, f32 compute ---------------------------
    arr3 = jax.random.normal(k3, (4, 4, F), dtype=jnp.float32).astype(jnp.bfloat16)
    out3 = jax.block_until_ready(dn_z(select_cols, arr3))
    ref3 = reference_denorm(dn_z, select_cols, arr3)
    assert jnp.allclose(out3.astype(jnp.float32), ref3, atol=2e-2, rtol=2e-2)

    # --- test 4: multi-step grid (>=2 blocks, exercises the parallel axis) ---
    arr4 = jax.random.normal(k4, (16, 32, F), dtype=jnp.float32)  # 4096 elems
    out4 = jax.block_until_ready(dn_z(select_cols, arr4))
    ref4 = reference_denorm(dn_z, select_cols, arr4)
    assert jnp.allclose(out4, ref4, atol=1e-5, rtol=1e-5)

    # --- test 5: F that does not divide 128 (lcm lane layout, F=10) ---------
    names10 = [f"c{i}" for i in range(10)]
    stat10 = {
        'mean': {n: 0.3 * (i + 1) for i, n in enumerate(names10)},
        'std':  {n: 1.0 + 0.25 * i for i, n in enumerate(names10)},
        'min':  {n: -0.5 * (i + 1) for i, n in enumerate(names10)},
        'max':  {n: 1.5 * (i + 1) for i, n in enumerate(names10)},
    }
    dn_10 = Denormalizer(stat10, feat_cols=[0, 9], feat_names=['c0', 'c9'],
                         norm_type='zscore')
    arr5 = jax.random.normal(k1, (3, 5, 10), dtype=jnp.float32)
    out5 = jax.block_until_ready(dn_10([0, 9], arr5))
    ref5 = reference_denorm(dn_10, [0, 9], arr5)
    assert jnp.allclose(out5, ref5, atol=1e-5, rtol=1e-5)

    print("KERNEL_OK")
</pallas_src>

<mosaic_0001>
module attributes {stable_mosaic.version = 11 : i64} {
  func.func @_denorm_kernel(%arg0: i32, %arg1: memref<1x128xf32, #tpu.memory_space<vmem>>, %arg2: memref<1x128xf32, #tpu.memory_space<vmem>>, %arg3: memref<1x128xf32, #tpu.memory_space<vmem>>, %arg4: memref<1x128xf32, #tpu.memory_space<vmem>>) attributes {dimension_semantics = [#tpu.dimension_semantics<parallel>], iteration_bounds = array<i64: 1>, scalar_prefetch = 0 : i64, scratch_operands = 0 : i64, tpu.core_type = #tpu.core_type<tc>, window_params = [{transform_indices = @transform_0, window_bounds = array<i64: 1, 128>}, {pipeline_mode = #tpu.pipeline_mode<synchronous>, transform_indices = @transform_1, window_bounds = array<i64: 1, 128>}, {pipeline_mode = #tpu.pipeline_mode<synchronous>, transform_indices = @transform_2, window_bounds = array<i64: 1, 128>}, {transform_indices = @transform_3, window_bounds = array<i64: 1, 128>}]} {
    %c0 = arith.constant 0 : index
    %c0_0 = arith.constant 0 : index
    %0 = vector.load %arg1[%c0, %c0_0] : memref<1x128xf32, #tpu.memory_space<vmem>>, vector<1x128xf32>
    %c0_1 = arith.constant 0 : index
    %c0_2 = arith.constant 0 : index
    %1 = vector.load %arg2[%c0_1, %c0_2] : memref<1x128xf32, #tpu.memory_space<vmem>>, vector<1x128xf32>
    %2 = arith.mulf %0, %1 : vector<1x128xf32>
    %c0_3 = arith.constant 0 : index
    %c0_4 = arith.constant 0 : index
    %3 = vector.load %arg3[%c0_3, %c0_4] : memref<1x128xf32, #tpu.memory_space<vmem>>, vector<1x128xf32>
    %4 = arith.addf %2, %3 : vector<1x128xf32>
    %c0_5 = arith.constant 0 : index
    %c0_6 = arith.constant 0 : index
    %5 = vector.load %arg4[%c0_5, %c0_6] : memref<1x128xf32, #tpu.memory_space<vmem>>, vector<1x128xf32>
    tpu.vector_store %arg4[%c0_5, %c0_6], %4 {strides = array<i32>} : memref<1x128xf32, #tpu.memory_space<vmem>>, vector<1x128xf32>,
    return
  }
  func.func @transform_0(%arg0: i32) -> (i32, i32) {
    %c0_i32 = arith.constant 0 : i32
    %c0_i32_0 = arith.constant 0 : i32
    return %arg0, %c0_i32 : i32, i32
  }
  func.func @transform_1(%arg0: i32) -> (i32, i32) {
    %c0_i32 = arith.constant 0 : i32
    %c0_i32_0 = arith.constant 0 : i32
    %c0_i32_1 = arith.constant 0 : i32
    return %c0_i32, %c0_i32_0 : i32, i32
  }
  func.func @transform_2(%arg0: i32) -> (i32, i32) {
    %c0_i32 = arith.constant 0 : i32
    %c0_i32_0 = arith.constant 0 : i32
    %c0_i32_1 = arith.constant 0 : i32
    return %c0_i32, %c0_i32_0 : i32, i32
  }
  func.func @transform_3(%arg0: i32) -> (i32, i32) {
    %c0_i32 = arith.constant 0 : i32
    %c0_i32_0 = arith.constant 0 : i32
    return %arg0, %c0_i32 : i32, i32
  }
}

</mosaic_0001>

<llo_original>
// kernel: _denorm_core.1
$region0: #{_denorm_core.1}
  #allocation0 [shape = 'u32[]', space=smem, size = 0x4, offset = 0x4, fixed_abs, tag = 'smem constant byte address 0x4 - core index']
  #allocation1 [shape = 'u32[144,128]{1,0:T(1,128)}', space=vmem, size = 0x12000, scoped, tag = 'internal scratch']
  %s0 = inlined_call_operand.vmem [shape: f32[1,128], index: 0, kind: input, shape index: {}]
  %s1 = inlined_call_operand.vmem [shape: f32[1,128], index: 1, kind: input, shape index: {}]
  %s2 = inlined_call_operand.vmem [shape: f32[1,128], index: 2, kind: input, shape index: {}]
  %s3 = inlined_call_operand.vmem [shape: f32[1,128], index: 3, kind: output, shape index: {}]
  %s4 = sld [smem:[#allocation0]]
  $region22: #{_denorm_core.1} parent=0
    _
  %s6 = ssub.s32 1, %s4
  %s7 = scalar_select 0, %s6, %s4
  // Predicated region
  $region2: #{_denorm_core.1} parent=0 // pred_check
    _
  $region3: #{_denorm_core.1} parent=0 // pred_check_branch
    %9 = sbr.rel (0) target = $region5
  $region4: #{_denorm_core.1} parent=0 // pred_region
    _
  $region5: #{_denorm_core.1} parent=0 // pred_fallthru
    _
  // Predicated region
  $region6: #{_denorm_core.1} parent=0 // pred_check
    _
  $region7: #{_denorm_core.1} parent=0 // pred_check_branch
    %11 = sbr.rel (0) target = $region9
  $region8: #{_denorm_core.1} parent=0 // pred_region
    _
  $region9: #{_denorm_core.1} parent=0 // pred_fallthru
    _
  // Predicated region
  $region10: #{_denorm_core.1} parent=0 // pred_check
    _
  $region11: #{_denorm_core.1} parent=0 // pred_check_branch
    %13 = sbr.rel (0) target = $region13
  $region12: #{_denorm_core.1} parent=0 // pred_region
    _
  $region13: #{_denorm_core.1} parent=0 // pred_fallthru
    _
  %v14 = vld [vmem:[%s0] sm:$0x1]
  %v15 = vld [vmem:[%s1] sm:$0x1]
  %v16 = vmul.f32 %v14, %v15
  %v17 = vld [vmem:[%s2] sm:$0x1]
  %v18 = vadd.f32 %v16, %v17
  %19 = vst [vmem:[%s3] sm:$0x1] %v18
  // Predicated region
  $region14: #{_denorm_core.1} parent=0 // pred_check
    _
  $region15: #{_denorm_core.1} parent=0 // pred_check_branch
    %21 = sbr.rel (0) target = $region17
  $region16: #{_denorm_core.1} parent=0 // pred_region
    _
  $region17: #{_denorm_core.1} parent=0 // pred_fallthru
    _
  // Predicated region
  $region18: #{_denorm_core.1} parent=0 // pred_check
    _
  $region19: #{_denorm_core.1} parent=0 // pred_check_branch
    %23 = sbr.rel (0) target = $region21
  $region20: #{_denorm_core.1} parent=0 // pred_region
    _
  $region21: #{_denorm_core.1} parent=0 // pred_fallthru
    _

</llo_original>
